<compile_context>
chip_gen: v7x
topology: tpu7x:2x2x1
jax: 0.10.0
libtpu: 0.0.40
codegen_flags: <defaults>
</compile_context>

<pallas_src>
import math

import jax
import jax.numpy as jnp
from jax.experimental import pallas as pl
from jax.experimental.pallas import tpu as pltpu


# ----------------------------- kernels -------------------------------------


def attention_weights_kernel(x_ref, w1_ref, b1_ref, w2_ref, b2_ref, wts_ref):
    """projection MLP + softmax over the sequence axis for a (tb, S, H) tile."""
    tb, S, H = x_ref.shape

    # Linear(H, 64) + ReLU on the MXU/VPU; leading dims collapsed, lane dim stays H.
    x2 = x_ref[...].reshape(tb * S, H)
    h = jnp.dot(x2, w1_ref[...], preferred_element_type=jnp.float32) + b1_ref[...]
    h = jnp.maximum(h, 0.0)                                            # (tb*S, 64)

    # Linear(64, 1): degenerate N=1 -> VPU multiply + XLU lane reduction (no MXU),
    # w2 passed as a (1, 64) row, b2 as a scalar in SMEM.
    energy = jnp.sum(h * w2_ref[...], axis=-1, keepdims=True) + b2_ref[0, 0]
    energy = energy.reshape(tb, S)                                     # (tb, S)

    # softmax over dim=1 (exact denominator; approx reciprocal not worth the error).
    m = jnp.max(energy, axis=1, keepdims=True)
    e = jnp.exp(energy - m)
    wts_ref[...] = e / jnp.sum(e, axis=1, keepdims=True)


def weighted_sum_kernel(wts_ref, xflat_ref, out_ref):
    """out[i, n-block] = wts[i, :] @ x_flat[:, n-block]   (literal PyTorch broadcast)."""
    out_ref[...] = jnp.dot(wts_ref[...], xflat_ref[...],
                           preferred_element_type=jnp.float32)


# --------------------------- tile selection ---------------------------------


def _pick_tile(total, target, align):
    """Largest t <= min(target, total) with total % t == 0 and t % align == 0.
    Falls back to the full extent (always legal as a block dim)."""
    t = (min(target, total) // align) * align
    while t >= align:
        if total % t == 0:
            return t
        t -= align
    return total


def _col_tile(ncols, nrows, tm, s, budget_bytes=20 << 20):
    """Column tile for the weighted-sum matmul under a double-buffered f32 budget."""
    # blocks per step: wts (tm, s), x_flat (nrows, tn), out (tm, tn); 2 buffers, 4 B.
    max_tn = (budget_bytes // 8 - tm * s) // max(1, nrows + tm)
    max_tn = max(128, max_tn)
    if ncols >= 256:
        # prefer >= 2 column steps so a 2-TC chip (v7x) always has work to split.
        max_tn = min(max_tn, max(128, (ncols // 2 // 128) * 128))
    return _pick_tile(ncols, max_tn, 128)


def _vmem_limit(block_bytes):
    return int(min(48 << 20, max(16 << 20, 2 * block_bytes)))


# ------------------------------ wrapper -------------------------------------


def self_attention(x, w1, b1, w2_row, b2):
    """x: (B, S, H) f32; w1: (H, 64); b1: (1, 64); w2_row: (1, 64); b2: (1, 1)."""
    B, S, H = x.shape
    assert B == S, "literal PyTorch broadcast in this module requires batch == seq"

    # ---- Kernel A: attention weights (tiny, one stream of x) ----------------
    tb_w = _pick_tile(B, max(8, (1 << 20) // max(1, S * H)), 8)
    bytes_a = 4 * (2 * (tb_w * S * H + tb_w * S) + H * 64 + 3 * 64)
    wts = pl.pallas_call(
        attention_weights_kernel,
        grid=(B // tb_w,),
        in_specs=[
            pl.BlockSpec((tb_w, S, H), lambda i: (i, 0, 0)),          # x tile
            pl.BlockSpec((H, 64), lambda i: (0, 0)),                  # W1
            pl.BlockSpec((1, 64), lambda i: (0, 0)),                  # b1
            pl.BlockSpec((1, 64), lambda i: (0, 0)),                  # W2 as row
            pl.BlockSpec(memory_space=pltpu.MemorySpace.SMEM),        # b2 scalar
        ],
        out_specs=pl.BlockSpec((tb_w, S), lambda i: (i, 0)),
        out_shape=jax.ShapeDtypeStruct((B, S), jnp.float32),
        compiler_params=pltpu.CompilerParams(
            dimension_semantics=("parallel",),
            vmem_limit_bytes=_vmem_limit(bytes_a)),
        cost_estimate=pl.CostEstimate(
            flops=2 * B * S * H * 64 + 4 * B * S * 64,
            transcendentals=B * S,
            bytes_accessed=4 * (B * S * H + B * S + H * 64 + 3 * 64)),
    )(x, w1, b1, w2_row, b2)

    # ---- Kernel B: weighted-sum matmul, tiled over output columns -----------
    ncols = S * H
    x_flat = x.reshape(B, ncols)                     # free reshape of contiguous HBM
    tm = _pick_tile(B, 256, 8)
    tn = _col_tile(ncols, B, tm, S)
    bytes_b = 4 * 2 * (tm * S + B * tn + tm * tn)

    out_flat = pl.pallas_call(
        weighted_sum_kernel,
        # n (columns) is the OUTER axis so the x_flat block is constant across the
        # inner row axis (fetched once per column block); both axes are parallel.
        grid=(ncols // tn, B // tm),
        in_specs=[
            pl.BlockSpec((tm, S), lambda n, i: (i, 0)),               # wts rows
            pl.BlockSpec((B, tn), lambda n, i: (0, n)),               # x_flat columns
        ],
        out_specs=pl.BlockSpec((tm, tn), lambda n, i: (i, n)),        # lane-dense slab
        out_shape=jax.ShapeDtypeStruct((B, ncols), jnp.float32),
        compiler_params=pltpu.CompilerParams(
            dimension_semantics=("parallel", "parallel"),
            vmem_limit_bytes=_vmem_limit(bytes_b)),
        cost_estimate=pl.CostEstimate(
            flops=2 * B * S * ncols,
            transcendentals=0,
            bytes_accessed=4 * (2 * B * ncols + (ncols // tn) * B * S)),
    )(wts, x_flat)

    # Host-side reshapes of contiguous arrays are free.
    return out_flat.reshape(B, S, H), wts.reshape(B, S, 1)


# ------------------------------ reference -----------------------------------


def _reference(x, w1, b1, w2_row, b2):
    """Pure-JAX replica of the literal PyTorch forward (for verification)."""
    h = jnp.maximum(jnp.einsum('bsh,hd->bsd', x, w1) + b1[0], 0.0)
    energy = jnp.einsum('bsd,d->bs', h, w2_row[0]) + b2[0, 0]          # (B, S)
    weights = jax.nn.softmax(energy, axis=1)[..., None]                # (B, S, 1)
    # (x * weights.unsqueeze(-1)).sum(dim=1) with PyTorch broadcasting:
    outputs = jnp.einsum('ij,jkl->ikl', weights[..., 0], x)            # (B, S, H)
    return outputs, weights


if __name__ == "__main__":
    B, S, H = 8, 8, 32   # literal broadcast semantics require B == S
    key = jax.random.PRNGKey(0)
    kx, k1, kb1, k2, kb2 = jax.random.split(key, 5)

    x = jax.random.normal(kx, (B, S, H), dtype=jnp.float32)

    # Deterministic parameter init (PyTorch-Linear-like uniform fan-in scaling).
    lim1 = 1.0 / math.sqrt(H)
    w1 = jax.random.uniform(k1, (H, 64), jnp.float32, -lim1, lim1)
    b1 = jax.random.uniform(kb1, (1, 64), jnp.float32, -lim1, lim1)
    lim2 = 1.0 / math.sqrt(64.0)
    w2_row = jax.random.uniform(k2, (1, 64), jnp.float32, -lim2, lim2)   # Linear(64,1) weight as row
    b2 = jax.random.uniform(kb2, (1, 1), jnp.float32, -lim2, lim2)

    out, wts = self_attention(x, w1, b1, w2_row, b2)
    jax.block_until_ready(out)
    jax.block_until_ready(wts)

    ref_out, ref_wts = _reference(x, w1, b1, w2_row, b2)
    assert jnp.allclose(wts, ref_wts, atol=1e-5, rtol=1e-5)
    assert jnp.allclose(out, ref_out, atol=1e-4, rtol=1e-4)

    print("KERNEL_OK")
</pallas_src>

<mosaic_0001>
module attributes {stable_mosaic.version = 11 : i64} {
  func.func @attention_weights_kernel(%arg0: i32, %arg1: memref<8x8x32xf32, #tpu.memory_space<vmem>>, %arg2: memref<32x64xf32, #tpu.memory_space<vmem>>, %arg3: memref<1x64xf32, #tpu.memory_space<vmem>>, %arg4: memref<1x64xf32, #tpu.memory_space<vmem>>, %arg5: memref<1x1xf32, #tpu.memory_space<smem>>, %arg6: memref<8x8xf32, #tpu.memory_space<vmem>>) attributes {dimension_semantics = [#tpu.dimension_semantics<parallel>], iteration_bounds = array<i64: 1>, scalar_prefetch = 0 : i64, scratch_operands = 0 : i64, tpu.core_type = #tpu.core_type<tc>, window_params = [{transform_indices = @transform_0, window_bounds = array<i64: 8, 8, 32>}, {pipeline_mode = #tpu.pipeline_mode<synchronous>, transform_indices = @transform_1, window_bounds = array<i64: 32, 64>}, {pipeline_mode = #tpu.pipeline_mode<synchronous>, transform_indices = @transform_2, window_bounds = array<i64: 1, 64>}, {pipeline_mode = #tpu.pipeline_mode<synchronous>, transform_indices = @transform_3, window_bounds = array<i64: 1, 64>}, {transform_indices = @transform_4, window_bounds = array<i64: 1, 1>}, {transform_indices = @transform_5, window_bounds = array<i64: 8, 8>}]} {
    %c0 = arith.constant 0 : index
    %c0_0 = arith.constant 0 : index
    %c0_1 = arith.constant 0 : index
    %0 = vector.load %arg1[%c0, %c0_0, %c0_1] : memref<8x8x32xf32, #tpu.memory_space<vmem>>, vector<8x8x32xf32>
    %1 = vector.shape_cast %0 : vector<8x8x32xf32> to vector<64x32xf32>
    %c0_2 = arith.constant 0 : index
    %c0_3 = arith.constant 0 : index
    %2 = vector.load %arg2[%c0_2, %c0_3] : memref<32x64xf32, #tpu.memory_space<vmem>>, vector<32x64xf32>
    %cst = arith.constant dense<0.000000e+00> : vector<64x64xf32>
    %3 = tpu.matmul %1, %2, %cst {dimension_numbers = #tpu.dot_dimension_numbers<[1], [0], [0], [1], [0, 0, 1, 1], [], []>} : vector<64x32xf32>, vector<32x64xf32>, vector<64x64xf32> -> vector<64x64xf32>
    %c0_4 = arith.constant 0 : index
    %c0_5 = arith.constant 0 : index
    %4 = vector.load %arg3[%c0_4, %c0_5] : memref<1x64xf32, #tpu.memory_space<vmem>>, vector<1x64xf32>
    %5 = vector.broadcast %4 : vector<1x64xf32> to vector<64x64xf32>
    %6 = arith.addf %3, %5 : vector<64x64xf32>
    %cst_6 = arith.constant 0.000000e+00 : f32
    %7 = vector.broadcast %cst_6 : f32 to vector<64x64xf32>
    %8 = arith.maximumf %6, %7 : vector<64x64xf32>
    %c0_7 = arith.constant 0 : index
    %c0_8 = arith.constant 0 : index
    %9 = vector.load %arg4[%c0_7, %c0_8] : memref<1x64xf32, #tpu.memory_space<vmem>>, vector<1x64xf32>
    %10 = vector.broadcast %9 : vector<1x64xf32> to vector<64x64xf32>
    %11 = arith.mulf %8, %10 : vector<64x64xf32>
    %cst_9 = arith.constant dense<0.000000e+00> : vector<64xf32>
    %12 = vector.multi_reduction <add>, %11, %cst_9 [1] : vector<64x64xf32> to vector<64xf32>
    %13 = vector.shape_cast %12 : vector<64xf32> to vector<64x1xf32>
    %c0_10 = arith.constant 0 : index
    %c0_11 = arith.constant 0 : index
    %14 = memref.load %arg5[%c0_10, %c0_11] : memref<1x1xf32, #tpu.memory_space<smem>>
    %15 = vector.broadcast %14 : f32 to vector<64x1xf32>
    %16 = arith.addf %13, %15 : vector<64x1xf32>
    %17 = vector.shape_cast %16 : vector<64x1xf32> to vector<8x8xf32>
    %cst_12 = arith.constant dense<0xFF800000> : vector<8xf32>
    %18 = vector.multi_reduction <maximumf>, %17, %cst_12 [1] : vector<8x8xf32> to vector<8xf32>
    %19 = vector.shape_cast %18 : vector<8xf32> to vector<8x1xf32>
    %20 = vector.broadcast %19 : vector<8x1xf32> to vector<8x8xf32>
    %21 = arith.subf %17, %20 : vector<8x8xf32>
    %22 = math.exp %21 : vector<8x8xf32>
    %cst_13 = arith.constant dense<0.000000e+00> : vector<8xf32>
    %23 = vector.multi_reduction <add>, %22, %cst_13 [1] : vector<8x8xf32> to vector<8xf32>
    %24 = vector.shape_cast %23 : vector<8xf32> to vector<8x1xf32>
    %25 = vector.broadcast %24 : vector<8x1xf32> to vector<8x8xf32>
    %26 = arith.divf %22, %25 : vector<8x8xf32>
    %c0_14 = arith.constant 0 : index
    %c0_15 = arith.constant 0 : index
    %27 = vector.load %arg6[%c0_14, %c0_15] : memref<8x8xf32, #tpu.memory_space<vmem>>, vector<8x8xf32>
    tpu.vector_store %arg6[%c0_14, %c0_15], %26 {strides = array<i32>} : memref<8x8xf32, #tpu.memory_space<vmem>>, vector<8x8xf32>,
    return
  }
  func.func @transform_0(%arg0: i32) -> (i32, i32, i32) {
    %c0_i32 = arith.constant 0 : i32
    %c0_i32_0 = arith.constant 0 : i32
    %c0_i32_1 = arith.constant 0 : i32
    return %arg0, %c0_i32, %c0_i32_0 : i32, i32, i32
  }
  func.func @transform_1(%arg0: i32) -> (i32, i32) {
    %c0_i32 = arith.constant 0 : i32
    %c0_i32_0 = arith.constant 0 : i32
    %c0_i32_1 = arith.constant 0 : i32
    return %c0_i32, %c0_i32_0 : i32, i32
  }
  func.func @transform_2(%arg0: i32) -> (i32, i32) {
    %c0_i32 = arith.constant 0 : i32
    %c0_i32_0 = arith.constant 0 : i32
    %c0_i32_1 = arith.constant 0 : i32
    return %c0_i32, %c0_i32_0 : i32, i32
  }
  func.func @transform_3(%arg0: i32) -> (i32, i32) {
    %c0_i32 = arith.constant 0 : i32
    %c0_i32_0 = arith.constant 0 : i32
    %c0_i32_1 = arith.constant 0 : i32
    return %c0_i32, %c0_i32_0 : i32, i32
  }
  func.func @transform_4(%arg0: i32) -> (i32, i32) {
    %c0_i32 = arith.constant 0 : i32
    %c0_i32_0 = arith.constant 0 : i32
    %c0_i32_1 = arith.constant 0 : i32
    return %c0_i32, %c0_i32_0 : i32, i32
  }
  func.func @transform_5(%arg0: i32) -> (i32, i32) {
    %c0_i32 = arith.constant 0 : i32
    %c0_i32_0 = arith.constant 0 : i32
    return %arg0, %c0_i32 : i32, i32
  }
}

</mosaic_0001>

<llo_original>
// kernel: tpu_custom_call.1
$region0: #{tpu_custom_call.1}
  #allocation0 [shape = 'u32[]', space=smem, size = 0x4, offset = 0x4, fixed_abs, tag = 'smem constant byte address 0x4 - core index']
  #allocation1 [shape = 'u32[144,128]{1,0:T(1,128)}', space=vmem, size = 0x12000, scoped, tag = 'internal scratch']
  #allocation2 [shape = 'f32[1,1]{1,0:T(1,128)S(6)}', space=smem, size = 0x200, scoped, tag = 'scoped memory for tpu_custom_call.1']
  %s0 = inlined_call_operand.hbm [shape: f32[8,8,32], index: 0, kind: input, shape index: {}]
  %s1 = inlined_call_operand.hbm [shape: f32[32,64], index: 1, kind: input, shape index: {}]
  %s2 = inlined_call_operand.vmem [shape: f32[1,64], index: 2, kind: input, shape index: {}]
  %s3 = inlined_call_operand.vmem [shape: f32[1,64], index: 3, kind: input, shape index: {}]
  %s4 = inlined_call_operand.<no memory space> [shape: f32[1,1], index: 4, kind: input, shape index: {}]
  %s5 = inlined_call_operand.hbm [shape: f32[8,8], index: 5, kind: output, shape index: {}]
  %s6 = sld [smem:[#allocation0]]
  $region38: #{tpu_custom_call.1} parent=0
    _
  %s8 = ssub.s32 1, %s6
  %s9 = scalar_select 0, %s8, %s6
  %10 = sst [smem:[#allocation2]] %s4
  $region1: #{tpu_custom_call.1} parent=0
    #allocation3 [shape = 'u8[32768]{0}', space=vmem, size = 0x8000, scoped, tag = 'input window, operand 0, single buffered']
    #allocation4 [shape = 's32[1]{0}', space=sflag, size = 0x4, scoped, tag = 'scoped memory for tpu_custom_call.1']
    #allocation5 [shape = 's32[1]{0}', space=sflag, size = 0x4, scoped, tag = 'scoped memory for tpu_custom_call.1']
    #allocation6 [shape = 'u8[16384]{0}', space=vmem, size = 0x4000, scoped, tag = 'input window, operand 1, single buffered']
    #allocation7 [shape = 's32[1]{0}', space=sflag, size = 0x4, scoped, tag = 'scoped memory for tpu_custom_call.1']
    #allocation8 [shape = 'u8[4096]{0}', space=vmem, size = 0x1000, scoped, tag = 'output window, operand 0, single buffered']
    %11 = vsyncpa [#allocation4], 0
    %12 = vsyncpa [#allocation7], 0
    %13 = vsyncpa [#allocation5], 0
    // Predicated region
    $region2: #{tpu_custom_call.1} parent=1 // pred_check
      _
    $region3: #{tpu_custom_call.1} parent=1 // pred_check_branch
      %15 = sbr.rel (0) target = $region5
    $region4: #{tpu_custom_call.1} parent=1 // pred_region
      %s17 = ssub.s32 1024, 1024
      %18 = vsyncadd [#allocation4], %s17
      %s19 = sshll.u32 [#allocation3], 4
      %s20 = int_to_ptr.vmem [resolvable:$true] %s19
      %25 = dma.hbm_to_vmem [thread:$0]  %s0, 1024, %s20, [#allocation4], 128, 128, 8
    $region5: #{tpu_custom_call.1} parent=1 // pred_fallthru
      _
    // Predicated region
    $region6: #{tpu_custom_call.1} parent=1 // pred_check
      _
    $region7: #{tpu_custom_call.1} parent=1 // pred_check_branch
      %27 = sbr.rel (0) target = $region9
    $region8: #{tpu_custom_call.1} parent=1 // pred_region
      %s29 = ssub.s32 512, 512
      %30 = vsyncadd [#allocation7], %s29
      %s31 = sshll.u32 [#allocation6], 4
      %s32 = int_to_ptr.vmem [resolvable:$true] %s31
      %37 = dma.hbm_to_vmem [thread:$0]  %s1, 512, %s32, [#allocation7], 128, 128, 8
    $region9: #{tpu_custom_call.1} parent=1 // pred_fallthru
      _
    // Predicated region
    $region10: #{tpu_custom_call.1} parent=1 // pred_check
      _
    $region11: #{tpu_custom_call.1} parent=1 // pred_check_branch
      %39 = sbr.rel (0) target = $region13
    $region12: #{tpu_custom_call.1} parent=1 // pred_region
      _
    $region13: #{tpu_custom_call.1} parent=1 // pred_fallthru
      _
    // Predicated region
    $region14: #{tpu_custom_call.1} parent=1 // pred_check
      _
    $region15: #{tpu_custom_call.1} parent=1 // pred_check_branch
      %41 = sbr.rel (0) target = $region17
    $region16: #{tpu_custom_call.1} parent=1 // pred_region
      _
    $region17: #{tpu_custom_call.1} parent=1 // pred_fallthru
      _
    // Predicated region
    $region18: #{tpu_custom_call.1} parent=1 // pred_check
      _
    $region19: #{tpu_custom_call.1} parent=1 // pred_check_branch
      %43 = sbr.rel (0) target = $region21
    $region20: #{tpu_custom_call.1} parent=1 // pred_region
      _
    $region21: #{tpu_custom_call.1} parent=1 // pred_fallthru
      _
    // Predicated region
    $region22: #{tpu_custom_call.1} parent=1 // pred_check
      _
    $region23: #{tpu_custom_call.1} parent=1 // pred_check_branch
      %45 = sbr.rel (0) target = $region25
    $region24: #{tpu_custom_call.1} parent=1 // pred_region
      %46 = dma.done [#allocation4], 1024
    $region25: #{tpu_custom_call.1} parent=1 // pred_fallthru
      _
    // Predicated region
    $region26: #{tpu_custom_call.1} parent=1 // pred_check
      _
    $region27: #{tpu_custom_call.1} parent=1 // pred_check_branch
      %48 = sbr.rel (0) target = $region29
    $region28: #{tpu_custom_call.1} parent=1 // pred_region
      %49 = dma.done [#allocation7], 512
    $region29: #{tpu_custom_call.1} parent=1 // pred_fallthru
      _
    %v50 = vld [vmem:[#allocation3] sm:$0xff]
    %v51 = vld [vmem:[#allocation3 + $0x8] sm:$0xff]
    %v52 = vld [vmem:[#allocation3 + $0x10] sm:$0xff]
    %v53 = vld [vmem:[#allocation3 + $0x18] sm:$0xff]
    %v54 = vld [vmem:[#allocation3 + $0x20] sm:$0xff]
    %v55 = vld [vmem:[#allocation3 + $0x28] sm:$0xff]
    %v56 = vld [vmem:[#allocation3 + $0x30] sm:$0xff]
    %v57 = vld [vmem:[#allocation3 + $0x38] sm:$0xff]
    %v58 = vld [vmem:[#allocation6] sm:$0xff]
    %v59 = vld [vmem:[#allocation6 + $0x8] sm:$0xff]
    %v60 = vld [vmem:[#allocation6 + $0x10] sm:$0xff]
    %v61 = vld [vmem:[#allocation6 + $0x18] sm:$0xff]
    %v62 = vld [vmem:[%s2] sm:$0x1]
    %v64 = vlaneseq
    %v65 = vshrl.u32 %v64, 7
    %v66 = vsub.s32 0, %v65
    %v67 = vrot.slane %v62, %v66
    %vm69 = vcmask 261120
    %v71 = vsel %vm69, %v50, 0
    %v74 = vsel %vm69, %v51, 0
    %v77 = vsel %vm69, %v52, 0
    %v80 = vsel %vm69, %v53, 0
    %v83 = vsel %vm69, %v54, 0
    %v86 = vsel %vm69, %v55, 0
    %v89 = vsel %vm69, %v56, 0
    %v92 = vsel %vm69, %v57, 0
    %94 = vmatprep.subr.mxu0 0.0
    %95 = vmatpush1.msra.mxu0 %v58
    %96 = vmatprep.subr.mxu0 0.0
    %97 = vmatpush1.msra.mxu0 %v59
    %98 = vmatprep.subr.mxu0 0.0
    %99 = vmatpush1.msra.mxu0 %v60
    %100 = vmatprep.subr.mxu0 0.0
    %101 = vmatpush1.msra.mxu0 %v61
    %102 = vmatprep.subr.mxu0 0.0
    %103 = vmatpush1.msra.mxu0 0.0
    %104 = vmatprep.subr.mxu0 0.0
    %105 = vmatpush1.msra.mxu0 0.0
    %106 = vmatprep.subr.mxu0 0.0
    %107 = vmatpush1.msra.mxu0 0.0
    %108 = vmatprep.subr.mxu0 0.0
    %109 = vmatpush1.msra.mxu0 0.0
    %110 = vmatprep.subr.mxu0 0.0
    %111 = vmatpush1.msra.mxu0 0.0
    %112 = vmatprep.subr.mxu0 0.0
    %113 = vmatpush1.msra.mxu0 0.0
    %114 = vmatprep.subr.mxu0 0.0
    %115 = vmatpush1.msra.mxu0 0.0
    %116 = vmatprep.subr.mxu0 0.0
    %117 = vmatpush1.msra.mxu0 0.0
    %118 = vmatprep.subr.mxu0 0.0
    %119 = vmatpush1.msra.mxu0 0.0
    %120 = vmatprep.subr.mxu0 0.0
    %121 = vmatpush1.msra.mxu0 0.0
    %122 = vmatprep.subr.mxu0 0.0
    %123 = vmatpush1.msra.mxu0 0.0
    %124 = vmatprep.subr.mxu0 0.0
    %125 = vmatpush1.msra.mxu0 0.0
    %126 = vmatprep.subr.mxu0 0.0
    %127 = vmatpush1.msra.mxu0 0.0
    %128 = vmatprep.subr.mxu0 0.0
    %129 = vmatpush1.msra.mxu0 0.0
    %130 = vmatprep.subr.mxu0 0.0
    %131 = vmatpush1.msra.mxu0 0.0
    %132 = vmatprep.subr.mxu0 0.0
    %133 = vmatpush1.msra.mxu0 0.0
    %134 = vmatprep.subr.mxu0 0.0
    %135 = vmatpush1.msra.mxu0 0.0
    %136 = vmatprep.subr.mxu0 0.0
    %137 = vmatpush1.msra.mxu0 0.0
    %138 = vmatprep.subr.mxu0 0.0
    %139 = vmatpush1.msra.mxu0 0.0
    %140 = vmatprep.subr.mxu0 0.0
    %141 = vmatpush1.msra.mxu0 0.0
    %142 = vmatprep.subr.mxu0 0.0
    %143 = vmatpush1.msra.mxu0 0.0
    %144 = vmatprep.subr.mxu0 0.0
    %145 = vmatpush1.msra.mxu0 0.0
    %146 = vmatprep.subr.mxu0 0.0
    %147 = vmatpush1.msra.mxu0 0.0
    %148 = vmatprep.subr.mxu0 0.0
    %149 = vmatpush1.msra.mxu0 0.0
    %150 = vmatprep.subr.mxu0 0.0
    %151 = vmatpush1.msra.mxu0 0.0
    %152 = vmatprep.subr.mxu0 0.0
    %153 = vmatpush1.msra.mxu0 0.0
    %154 = vmatprep.subr.mxu0 0.0
    %155 = vmatpush1.msra.mxu0 0.0
    %156 = vmatprep.subr.mxu0 0.0
    %157 = vmatpush1.msra.mxu0 0.0
    %158 = vmatprep.mubr.f32.mxu0 0.0
    %159 = vmatmul.mubr.f32.gmra.mrb[0].mxu0 %v71
    %v160 = vpop.f32.mrb[0].mxu0
    %v161 = vadd.f32 %v67, %v160
    %v162 = vpop.f32.mrb[0].mxu0
    %163 = vmatprep.mubr.f32.mxu0 0.0
    %164 = vmatmul.mubr.f32.gmra.mrb[0].mxu0 %v74
    %v165 = vpop.f32.mrb[0].mxu0
    %v166 = vadd.f32 %v67, %v165
    %v167 = vpop.f32.mrb[0].mxu0
    %168 = vmatprep.mubr.f32.mxu0 0.0
    %169 = vmatmul.mubr.f32.gmra.mrb[0].mxu0 %v77
    %v170 = vpop.f32.mrb[0].mxu0
    %v171 = vadd.f32 %v67, %v170
    %v172 = vpop.f32.mrb[0].mxu0
    %173 = vmatprep.mubr.f32.mxu0 0.0
    %174 = vmatmul.mubr.f32.gmra.mrb[0].mxu0 %v80
    %v175 = vpop.f32.mrb[0].mxu0
    %v176 = vadd.f32 %v67, %v175
    %v177 = vpop.f32.mrb[0].mxu0
    %178 = vmatprep.mubr.f32.mxu0 0.0
    %179 = vmatmul.mubr.f32.gmra.mrb[0].mxu0 %v83
    %v180 = vpop.f32.mrb[0].mxu0
    %v181 = vadd.f32 %v67, %v180
    %v182 = vpop.f32.mrb[0].mxu0
    %183 = vmatprep.mubr.f32.mxu0 0.0
    %184 = vmatmul.mubr.f32.gmra.mrb[0].mxu0 %v86
    %v185 = vpop.f32.mrb[0].mxu0
    %v186 = vadd.f32 %v67, %v185
    %v187 = vpop.f32.mrb[0].mxu0
    %188 = vmatprep.mubr.f32.mxu0 0.0
    %189 = vmatmul.mubr.f32.gmra.mrb[0].mxu0 %v89
    %v190 = vpop.f32.mrb[0].mxu0
    %v191 = vadd.f32 %v67, %v190
    %v192 = vpop.f32.mrb[0].mxu0
    %193 = vmatprep.mubr.f32.mxu0 0.0
    %194 = vmatmul.mubr.f32.gmra.mrb[0].mxu0 %v92
    %v195 = vpop.f32.mrb[0].mxu0
    %v196 = vadd.f32 %v67, %v195
    %v197 = vpop.f32.mrb[0].mxu0
    %198 = vdwg.mxu0
    %v199 = vmax.f32 %v161, 0.0
    %v200 = vmax.f32 %v166, 0.0
    %v201 = vmax.f32 %v171, 0.0
    %v202 = vmax.f32 %v176, 0.0
    %v203 = vmax.f32 %v181, 0.0
    %v204 = vmax.f32 %v186, 0.0
    %v205 = vmax.f32 %v191, 0.0
    %v206 = vmax.f32 %v196, 0.0
    %v207 = vld [vmem:[%s3] sm:$0x1]
    %v209 = vlaneseq
    %v210 = vshrl.u32 %v209, 7
    %v211 = vsub.s32 0, %v210
    %v212 = vrot.slane %v207, %v211
    %v214 = vmul.f32 %v199, %v212
    %v215 = vmul.f32 %v200, %v212
    %v216 = vmul.f32 %v201, %v212
    %v217 = vmul.f32 %v202, %v212
    %v218 = vmul.f32 %v203, %v212
    %v219 = vmul.f32 %v204, %v212
    %v220 = vmul.f32 %v205, %v212
    %v221 = vmul.f32 %v206, %v212
    %vm222 = vcmask 523264
    %v223 = vsel %vm222, %v214, 0.0
    %224 = vadd.xlane.f32.xlu0 %v223
    %v225 = vpop.xlane.xlu0 %224
    %v226 = vsel %vm222, %v215, 0.0
    %227 = vadd.xlane.f32.xlu0 %v226
    %v228 = vpop.xlane.xlu0 %227
    %v229 = vsel %vm222, %v216, 0.0
    %230 = vadd.xlane.f32.xlu0 %v229
    %v231 = vpop.xlane.xlu0 %230
    %v232 = vsel %vm222, %v217, 0.0
    %233 = vadd.xlane.f32.xlu0 %v232
    %v234 = vpop.xlane.xlu0 %233
    %v235 = vsel %vm222, %v218, 0.0
    %236 = vadd.xlane.f32.xlu0 %v235
    %v237 = vpop.xlane.xlu0 %236
    %v238 = vsel %vm222, %v219, 0.0
    %239 = vadd.xlane.f32.xlu0 %v238
    %v240 = vpop.xlane.xlu0 %239
    %v241 = vsel %vm222, %v220, 0.0
    %242 = vadd.xlane.f32.xlu0 %v241
    %v243 = vpop.xlane.xlu0 %242
    %v244 = vsel %vm222, %v221, 0.0
    %245 = vadd.xlane.f32.xlu0 %v244
    %v246 = vpop.xlane.xlu0 %245
    %s247 = sld [smem:[#allocation2]]
    %v248 = vstv %s247
    %v249 = vadd.f32 %v225, %v248
    %v250 = vadd.f32 %v228, %v248
    %v251 = vadd.f32 %v231, %v248
    %v252 = vadd.f32 %v234, %v248
    %v253 = vadd.f32 %v237, %v248
    %v254 = vadd.f32 %v240, %v248
    %v255 = vadd.f32 %v243, %v248
    %v256 = vadd.f32 %v246, %v248
    %v265 = vlaneseq
    %v266 = vand.u32 %v265, 127
    %v267 = vlaneseq
    %v268 = vshrl.u32 %v267, 7
    %v269 = vsub.s32 %v266, %v268
    %v270 = vrot.slane %v249, %v269
    %v271 = vlaneseq
    %v272 = vshrl.u32 %v271, 7
    %v273 = vsub.s32 %v266, %v272
    %v274 = vrot.slane %v250, %v273
    %v275 = vlaneseq
    %v276 = vshrl.u32 %v275, 7
    %v277 = vsub.s32 %v266, %v276
    %v278 = vrot.slane %v251, %v277
    %v279 = vlaneseq
    %v280 = vshrl.u32 %v279, 7
    %v281 = vsub.s32 %v266, %v280
    %v282 = vrot.slane %v252, %v281
    %v283 = vlaneseq
    %v284 = vshrl.u32 %v283, 7
    %v285 = vsub.s32 %v266, %v284
    %v286 = vrot.slane %v253, %v285
    %v287 = vlaneseq
    %v288 = vshrl.u32 %v287, 7
    %v289 = vsub.s32 %v266, %v288
    %v290 = vrot.slane %v254, %v289
    %v291 = vlaneseq
    %v292 = vshrl.u32 %v291, 7
    %v293 = vsub.s32 %v266, %v292
    %v294 = vrot.slane %v255, %v293
    %v295 = vlaneseq
    %v296 = vshrl.u32 %v295, 7
    %v297 = vsub.s32 %v266, %v296
    %v298 = vrot.slane %v256, %v297
    %vm299 = vcmask 1041409
    %v300 = vsel %vm299, %v274, %v270
    %vm301 = vcmask 1042434
    %v302 = vsel %vm301, %v278, %v300
    %vm303 = vcmask 1043459
    %v304 = vsel %vm303, %v282, %v302
    %vm305 = vcmask 1044484
    %v306 = vsel %vm305, %v286, %v304
    %vm307 = vcmask 1045509
    %v308 = vsel %vm307, %v290, %v306
    %vm309 = vcmask 1046534
    %v310 = vsel %vm309, %v294, %v308
    %vm311 = vcmask 1047559
    %v312 = vsel %vm311, %v298, %v310
    %vm314 = vcmask 64512
    %v315 = vsel %vm314, %v312, -inf
    %316 = vmax.xlane.f32.xlu0 %v315
    %v317 = vpop.xlane.xlu0 %316
    %v319 = vlaneseq
    %v320 = vshrl.u32 %v319, 7
    %v321 = vsub.s32 0, %v320
    %v322 = vrot.slane %v317, %v321
    %v323 = vlaneseq
    %v324 = vshrl.u32 %v323, 7
    %v325 = vsub.s32 1, %v324
    %v326 = vrot.slane %v317, %v325
    %v327 = vlaneseq
    %v328 = vshrl.u32 %v327, 7
    %v329 = vsub.s32 2, %v328
    %v330 = vrot.slane %v317, %v329
    %v331 = vlaneseq
    %v332 = vshrl.u32 %v331, 7
    %v333 = vsub.s32 3, %v332
    %v334 = vrot.slane %v317, %v333
    %v335 = vlaneseq
    %v336 = vshrl.u32 %v335, 7
    %v337 = vsub.s32 4, %v336
    %v338 = vrot.slane %v317, %v337
    %v339 = vlaneseq
    %v340 = vshrl.u32 %v339, 7
    %v341 = vsub.s32 5, %v340
    %v342 = vrot.slane %v317, %v341
    %v343 = vlaneseq
    %v344 = vshrl.u32 %v343, 7
    %v345 = vsub.s32 6, %v344
    %v346 = vrot.slane %v317, %v345
    %v347 = vlaneseq
    %v348 = vshrl.u32 %v347, 7
    %v349 = vsub.s32 7, %v348
    %v350 = vrot.slane %v317, %v349
    %v359 = vsub.f32 %v249, %v322
    %v360 = vsub.f32 %v250, %v326
    %v361 = vsub.f32 %v251, %v330
    %v362 = vsub.f32 %v252, %v334
    %v363 = vsub.f32 %v253, %v338
    %v364 = vsub.f32 %v254, %v342
    %v365 = vsub.f32 %v255, %v346
    %v366 = vsub.f32 %v256, %v350
    %v367 = vmul.f32 %v359, 1.442695
    %v368 = vpow.pop %v367
    %v369 = vmul.f32 %v360, 1.442695
    %v370 = vpow.pop %v369
    %v371 = vmul.f32 %v361, 1.442695
    %v372 = vpow.pop %v371
    %v373 = vmul.f32 %v362, 1.442695
    %v374 = vpow.pop %v373
    %v375 = vmul.f32 %v363, 1.442695
    %v376 = vpow.pop %v375
    %v377 = vmul.f32 %v364, 1.442695
    %v378 = vpow.pop %v377
    %v379 = vmul.f32 %v365, 1.442695
    %v380 = vpow.pop %v379
    %v381 = vmul.f32 %v366, 1.442695
    %v382 = vpow.pop %v381
    %391 = vset.pattern.permute.xlu0 0
    %392 = vperm.xlu0 %391, %v368
    %v393 = vpop.permute.xlu0 %392
    %394 = vset.pattern.permute.xlu0 0
    %395 = vperm.xlu0 %394, %v370
    %v396 = vpop.permute.xlu0 %395
    %397 = vset.pattern.permute.xlu0 0
    %398 = vperm.xlu0 %397, %v372
    %v399 = vpop.permute.xlu0 %398
    %400 = vset.pattern.permute.xlu0 0
    %401 = vperm.xlu0 %400, %v374
    %v402 = vpop.permute.xlu0 %401
    %403 = vset.pattern.permute.xlu0 0
    %404 = vperm.xlu0 %403, %v376
    %v405 = vpop.permute.xlu0 %404
    %406 = vset.pattern.permute.xlu0 0
    %407 = vperm.xlu0 %406, %v378
    %v408 = vpop.permute.xlu0 %407
    %409 = vset.pattern.permute.xlu0 0
    %410 = vperm.xlu0 %409, %v380
    %v411 = vpop.permute.xlu0 %410
    %412 = vset.pattern.permute.xlu0 0
    %413 = vperm.xlu0 %412, %v382
    %v414 = vpop.permute.xlu0 %413
    %v415 = vlaneseq
    %v416 = vshrl.u32 %v415, 7
    %v417 = vsub.s32 %v266, %v416
    %v418 = vrot.slane %v393, %v417
    %v419 = vlaneseq
    %v420 = vshrl.u32 %v419, 7
    %v421 = vsub.s32 %v266, %v420
    %v422 = vrot.slane %v396, %v421
    %v423 = vlaneseq
    %v424 = vshrl.u32 %v423, 7
    %v425 = vsub.s32 %v266, %v424
    %v426 = vrot.slane %v399, %v425
    %v427 = vlaneseq
    %v428 = vshrl.u32 %v427, 7
    %v429 = vsub.s32 %v266, %v428
    %v430 = vrot.slane %v402, %v429
    %v431 = vlaneseq
    %v432 = vshrl.u32 %v431, 7
    %v433 = vsub.s32 %v266, %v432
    %v434 = vrot.slane %v405, %v433
    %v435 = vlaneseq
    %v436 = vshrl.u32 %v435, 7
    %v437 = vsub.s32 %v266, %v436
    %v438 = vrot.slane %v408, %v437
    %v439 = vlaneseq
    %v440 = vshrl.u32 %v439, 7
    %v441 = vsub.s32 %v266, %v440
    %v442 = vrot.slane %v411, %v441
    %v443 = vlaneseq
    %v444 = vshrl.u32 %v443, 7
    %v445 = vsub.s32 %v266, %v444
    %v446 = vrot.slane %v414, %v445
    %v447 = vsel %vm299, %v422, %v418
    %v448 = vsel %vm301, %v426, %v447
    %v449 = vsel %vm303, %v430, %v448
    %v450 = vsel %vm305, %v434, %v449
    %v451 = vsel %vm307, %v438, %v450
    %v452 = vsel %vm309, %v442, %v451
    %v453 = vsel %vm311, %v446, %v452
    %v455 = vsel %vm314, %v453, 0.0
    %456 = vadd.xlane.f32.xlu0 %v455
    %v457 = vpop.xlane.xlu0 %456
    %v459 = vlaneseq
    %v460 = vshrl.u32 %v459, 7
    %v461 = vsub.s32 0, %v460
    %v462 = vrot.slane %v457, %v461
    %v463 = vlaneseq
    %v464 = vshrl.u32 %v463, 7
    %v465 = vsub.s32 1, %v464
    %v466 = vrot.slane %v457, %v465
    %v467 = vlaneseq
    %v468 = vshrl.u32 %v467, 7
    %v469 = vsub.s32 2, %v468
    %v470 = vrot.slane %v457, %v469
    %v471 = vlaneseq
    %v472 = vshrl.u32 %v471, 7
    %v473 = vsub.s32 3, %v472
    %v474 = vrot.slane %v457, %v473
    %v475 = vlaneseq
    %v476 = vshrl.u32 %v475, 7
    %v477 = vsub.s32 4, %v476
    %v478 = vrot.slane %v457, %v477
    %v479 = vlaneseq
    %v480 = vshrl.u32 %v479, 7
    %v481 = vsub.s32 5, %v480
    %v482 = vrot.slane %v457, %v481
    %v483 = vlaneseq
    %v484 = vshrl.u32 %v483, 7
    %v485 = vsub.s32 6, %v484
    %v486 = vrot.slane %v457, %v485
    %v487 = vlaneseq
    %v488 = vshrl.u32 %v487, 7
    %v489 = vsub.s32 7, %v488
    %v490 = vrot.slane %v457, %v489
    %v499 = vrcp.pop %v462
    %v500 = vmul.f32 %v368, %v499
    %v501 = vrcp.pop %v466
    %v502 = vmul.f32 %v370, %v501
    %v503 = vrcp.pop %v470
    %v504 = vmul.f32 %v372, %v503
    %v505 = vrcp.pop %v474
    %v506 = vmul.f32 %v374, %v505
    %v507 = vrcp.pop %v478
    %v508 = vmul.f32 %v376, %v507
    %v509 = vrcp.pop %v482
    %v510 = vmul.f32 %v378, %v509
    %v511 = vrcp.pop %v486
    %v512 = vmul.f32 %v380, %v511
    %v513 = vrcp.pop %v490
    %v514 = vmul.f32 %v382, %v513
    %523 = vset.pattern.permute.xlu0 0
    %524 = vperm.xlu0 %523, %v500
    %v525 = vpop.permute.xlu0 %524
    %526 = vset.pattern.permute.xlu0 0
    %527 = vperm.xlu0 %526, %v502
    %v528 = vpop.permute.xlu0 %527
    %529 = vset.pattern.permute.xlu0 0
    %530 = vperm.xlu0 %529, %v504
    %v531 = vpop.permute.xlu0 %530
    %532 = vset.pattern.permute.xlu0 0
    %533 = vperm.xlu0 %532, %v506
    %v534 = vpop.permute.xlu0 %533
    %535 = vset.pattern.permute.xlu0 0
    %536 = vperm.xlu0 %535, %v508
    %v537 = vpop.permute.xlu0 %536
    %538 = vset.pattern.permute.xlu0 0
    %539 = vperm.xlu0 %538, %v510
    %v540 = vpop.permute.xlu0 %539
    %541 = vset.pattern.permute.xlu0 0
    %542 = vperm.xlu0 %541, %v512
    %v543 = vpop.permute.xlu0 %542
    %544 = vset.pattern.permute.xlu0 0
    %545 = vperm.xlu0 %544, %v514
    %v546 = vpop.permute.xlu0 %545
    %v547 = vlaneseq
    %v548 = vshrl.u32 %v547, 7
    %v549 = vsub.s32 %v266, %v548
    %v550 = vrot.slane %v525, %v549
    %v551 = vlaneseq
    %v552 = vshrl.u32 %v551, 7
    %v553 = vsub.s32 %v266, %v552
    %v554 = vrot.slane %v528, %v553
    %v555 = vlaneseq
    %v556 = vshrl.u32 %v555, 7
    %v557 = vsub.s32 %v266, %v556
    %v558 = vrot.slane %v531, %v557
    %v559 = vlaneseq
    %v560 = vshrl.u32 %v559, 7
    %v561 = vsub.s32 %v266, %v560
    %v562 = vrot.slane %v534, %v561
    %v563 = vlaneseq
    %v564 = vshrl.u32 %v563, 7
    %v565 = vsub.s32 %v266, %v564
    %v566 = vrot.slane %v537, %v565
    %v567 = vlaneseq
    %v568 = vshrl.u32 %v567, 7
    %v569 = vsub.s32 %v266, %v568
    %v570 = vrot.slane %v540, %v569
    %v571 = vlaneseq
    %v572 = vshrl.u32 %v571, 7
    %v573 = vsub.s32 %v266, %v572
    %v574 = vrot.slane %v543, %v573
    %v575 = vlaneseq
    %v576 = vshrl.u32 %v575, 7
    %v577 = vsub.s32 %v266, %v576
    %v578 = vrot.slane %v546, %v577
    %v579 = vsel %vm299, %v554, %v550
    %v580 = vsel %vm301, %v558, %v579
    %v581 = vsel %vm303, %v562, %v580
    %v582 = vsel %vm305, %v566, %v581
    %v583 = vsel %vm307, %v570, %v582
    %v584 = vsel %vm309, %v574, %v583
    %v585 = vsel %vm311, %v578, %v584
    %587 = vst.msk [vmem:[#allocation8] sm:$0xff] %vm314, %v585
    // Predicated region
    $region30: #{tpu_custom_call.1} parent=1 // pred_check
      _
    $region31: #{tpu_custom_call.1} parent=1 // pred_check_branch
      %589 = sbr.rel (0) target = $region33
    $region32: #{tpu_custom_call.1} parent=1 // pred_region
      %s591 = ssub.s32 128, 128
      %592 = vsyncadd [#allocation5], %s591
      %s594 = sshll.u32 [#allocation8], 4
      %s595 = int_to_ptr.vmem [resolvable:$true] %s594
      %597 = dma.vmem_to_hbm [thread:$0]  %s595, 128, %s5, [#allocation5]
    $region33: #{tpu_custom_call.1} parent=1 // pred_fallthru
      _
    // Predicated region
    $region34: #{tpu_custom_call.1} parent=1 // pred_check
      _
    $region35: #{tpu_custom_call.1} parent=1 // pred_check_branch
      %599 = sbr.rel (0) target = $region37
    $region36: #{tpu_custom_call.1} parent=1 // pred_region
      %600 = dma.done [#allocation5], 128
    $region37: #{tpu_custom_call.1} parent=1 // pred_fallthru
      _
    %601 = vsyncpa [#allocation4], 1
    %602 = vsyncpa [#allocation7], 1
    %603 = vsyncpa [#allocation5], 1

</llo_original>
